<compile_context>
chip_gen: v7x
topology: tpu7x:2x2x1
jax: 0.10.0
libtpu: 0.0.40
codegen_flags: <defaults>
</compile_context>

<pallas_src>
import numpy as np
import jax
import jax.numpy as jnp
from jax.experimental import pallas as pl
from jax.experimental.pallas import tpu as pltpu


def _round_up(n, m):
    return ((n + m - 1) // m) * m


def _tpu_vmem_capacity():
    try:
        return int(pltpu.get_tpu_info().vmem_capacity_bytes)
    except Exception:
        return 64 * 1024 * 1024          # conservative fallback (v7x per-TC VMEM)


_VMEM_CAP = _tpu_vmem_capacity()
# ~3/4 of physical VMEM, capped at 100 MiB: ~96 MiB on v5e/v6e, 48 MiB on v7x.
_VMEM_LIMIT = int(min(100 * 1024 * 1024, (_VMEM_CAP * 3) // 4))
_BIG_VMEM = _VMEM_LIMIT >= 80 * 1024 * 1024
_TM_DEFAULT = 512 if _BIG_VMEM else 256


def _cparams(sem=("parallel",)):
    return pltpu.CompilerParams(dimension_semantics=sem,
                                vmem_limit_bytes=_VMEM_LIMIT)


def _pad_rows(x, n_rows):
    if x.shape[0] == n_rows:
        return x
    pad = n_rows - x.shape[0]
    return jnp.concatenate([x, jnp.zeros((pad,) + x.shape[1:], x.dtype)], axis=0)


def _row_tile(n, tmax=None):
    """Row-tile: multiple of 16, <= tmax, and (when possible) >= 2 grid steps."""
    if tmax is None:
        tmax = _TM_DEFAULT
    t = min(tmax, _round_up(max(n, 1), 16))
    if n > 16:
        t = min(t, _round_up((n + 1) // 2, 16))
    return max(16, t)


def _full_spec(a):
    return pl.BlockSpec(a.shape, lambda i: (0,) * a.ndim)


# -----------------------------------------------------------------------------
# Pallas kernels
# -----------------------------------------------------------------------------

def resblock_pool(x_tokens, p, g=None):
    """GTNet_resblock + per-ROI average pooling.

    x_tokens: (R, HW, C) bf16 tokens -> (R, C) bf16.  Three 1x1 convs (matmuls,
    bf16 in / f32 acc) with folded BatchNorm, ReLU at the end, residual add
    (matching PyTorch: ReLU(Conv(x)) + x, no intermediate ReLUs), then per-ROI
    mean as one bf16 ones-matrix matmul scaled by 1/HW in f32.
    """
    R, HW, C = x_tokens.shape
    if g is None:
        g_max = 32 if _BIG_VMEM else 16
        g = max(16, min(g_max, _round_up(max(R // 2, 1), 16)))
    Rp = _round_up(R, g)
    if Rp != R:
        x_tokens = jnp.concatenate(
            [x_tokens, jnp.zeros((Rp - R, HW, C), x_tokens.dtype)], axis=0)
    x_flat = x_tokens.reshape(Rp * HW, C)
    # (g, g*HW) per-ROI sum operator: block-diagonal bf16 ones; scale applied in f32.
    pool = jnp.kron(jnp.eye(g, dtype=jnp.float32),
                    jnp.ones((1, HW), dtype=jnp.float32)).astype(jnp.bfloat16)
    inv_hw = 1.0 / float(HW)

    def kernel(x_ref, w1_ref, s1_ref, b1_ref, w2_ref, s2_ref, b2_ref,
               w3_ref, s3_ref, b3_ref, pool_ref, o_ref):
        x = x_ref[...]                                            # (g*HW, C) bf16
        h = jnp.dot(x, w1_ref[...], preferred_element_type=jnp.float32)
        h = h * s1_ref[...] + b1_ref[...]
        h = jnp.dot(h.astype(jnp.bfloat16), w2_ref[...],
                    preferred_element_type=jnp.float32)
        h = h * s2_ref[...] + b2_ref[...]
        h = jnp.dot(h.astype(jnp.bfloat16), w3_ref[...],
                    preferred_element_type=jnp.float32)
        h = h * s3_ref[...] + b3_ref[...]
        y = jnp.maximum(h, 0.0) + x.astype(jnp.float32)           # ReLU(Conv(x)) + x
        pooled = jnp.dot(pool_ref[...], y.astype(jnp.bfloat16),
                         preferred_element_type=jnp.float32) * inv_hw
        o_ref[...] = pooled.astype(o_ref.dtype)

    out = pl.pallas_call(
        kernel,
        out_shape=jax.ShapeDtypeStruct((Rp, C), jnp.bfloat16),
        grid=(Rp // g,),
        in_specs=[
            pl.BlockSpec((g * HW, C), lambda r: (r, 0)),
            _full_spec(p["w1"]), _full_spec(p["s1"]), _full_spec(p["b1"]),
            _full_spec(p["w2"]), _full_spec(p["s2"]), _full_spec(p["b2"]),
            _full_spec(p["w3"]), _full_spec(p["s3"]), _full_spec(p["b3"]),
            _full_spec(pool),
        ],
        out_specs=pl.BlockSpec((g, C), lambda r: (r, 0)),
        compiler_params=_cparams(),
    )(x_flat, p["w1"], p["s1"], p["b1"], p["w2"], p["s2"], p["b2"],
      p["w3"], p["s3"], p["b3"], pool)
    return out[:R]


def _fc_block_kernel(x_ref, w1_ref, b1_ref, w2_ref, b2_ref, o_ref):
    h = jnp.dot(x_ref[...].astype(jnp.bfloat16), w1_ref[...],
                preferred_element_type=jnp.float32) + b1_ref[...]
    y = jnp.dot(h.astype(jnp.bfloat16), w2_ref[...],
                preferred_element_type=jnp.float32) + b2_ref[...]
    o_ref[...] = jnp.maximum(y, 0.0).astype(o_ref.dtype)


def fc_block(x, params, out_dtype=jnp.float32, tm=None):
    """FC_block: Linear -> Linear -> ReLU, fused, tiled over rows."""
    w1, b1, w2, b2 = params
    N, K = x.shape
    dout = w2.shape[1]
    tm = _row_tile(N, tm)
    Np = _round_up(N, tm)
    xp = _pad_rows(x, Np)
    out = pl.pallas_call(
        _fc_block_kernel,
        out_shape=jax.ShapeDtypeStruct((Np, dout), out_dtype),
        grid=(Np // tm,),
        in_specs=[pl.BlockSpec((tm, K), lambda i: (i, 0)),
                  _full_spec(w1), _full_spec(b1),
                  _full_spec(w2), _full_spec(b2)],
        out_specs=pl.BlockSpec((tm, dout), lambda i: (i, 0)),
        compiler_params=_cparams(),
    )(xp, w1, b1, w2, b2)
    return out[:N]


def _make_linear_kernel(activation):
    def kernel(x_ref, w_ref, b_ref, o_ref):
        y = jnp.dot(x_ref[...].astype(jnp.bfloat16), w_ref[...],
                    preferred_element_type=jnp.float32) + b_ref[...]
        if activation == "relu":
            y = jnp.maximum(y, 0.0)
        o_ref[...] = y.astype(o_ref.dtype)
    return kernel


def linear(x, w, b, activation=None, out_dtype=jnp.float32, tm=None):
    """y = act(x @ w + b), tiled over rows; w's out dim is pre-padded to 128 lanes."""
    N, K = x.shape
    dout = w.shape[1]
    tm = _row_tile(N, tm)
    Np = _round_up(N, tm)
    xp = _pad_rows(x, Np)
    out = pl.pallas_call(
        _make_linear_kernel(activation),
        out_shape=jax.ShapeDtypeStruct((Np, dout), out_dtype),
        grid=(Np // tm,),
        in_specs=[pl.BlockSpec((tm, K), lambda i: (i, 0)),
                  _full_spec(w), _full_spec(b)],
        out_specs=pl.BlockSpec((tm, dout), lambda i: (i, 0)),
        compiler_params=_cparams(),
    )(xp, w, b)
    return out[:N]


def _pair_heads_kernel(x_ref, w1a_ref, w1b_ref, w1c_ref,
                       b1a_ref, b1b_ref, b1c_ref,
                       w2a_ref, b2a_ref, w2b_ref, b2b_ref, w2c_ref, b2c_ref,
                       oa_ref, ob_ref, oc_ref, acc_a, acc_b, acc_c):
    # Three FC_blocks sharing the same `pairs` rows (read once from HBM).
    # K is grid-tiled; first-Linear activations accumulate in f32 scratch.
    k = pl.program_id(1)

    @pl.when(k == 0)
    def _():
        acc_a[...] = jnp.zeros_like(acc_a)
        acc_b[...] = jnp.zeros_like(acc_b)
        acc_c[...] = jnp.zeros_like(acc_c)

    xb = x_ref[...]                                               # (tm, tk) bf16
    acc_a[...] += jnp.dot(xb, w1a_ref[...], preferred_element_type=jnp.float32)
    acc_b[...] += jnp.dot(xb, w1b_ref[...], preferred_element_type=jnp.float32)
    acc_c[...] += jnp.dot(xb, w1c_ref[...], preferred_element_type=jnp.float32)

    @pl.when(k == pl.num_programs(1) - 1)
    def _():
        ha = (acc_a[...] + b1a_ref[...]).astype(jnp.bfloat16)
        hb = (acc_b[...] + b1b_ref[...]).astype(jnp.bfloat16)
        hc = (acc_c[...] + b1c_ref[...]).astype(jnp.bfloat16)
        oa_ref[...] = jnp.maximum(
            jnp.dot(ha, w2a_ref[...], preferred_element_type=jnp.float32)
            + b2a_ref[...], 0.0).astype(oa_ref.dtype)
        ob_ref[...] = jnp.maximum(
            jnp.dot(hb, w2b_ref[...], preferred_element_type=jnp.float32)
            + b2b_ref[...], 0.0).astype(ob_ref.dtype)
        oc_ref[...] = jnp.maximum(
            jnp.dot(hc, w2c_ref[...], preferred_element_type=jnp.float32)
            + b2c_ref[...], 0.0).astype(oc_ref.dtype)


def pair_heads(pairs, params_a, params_b, params_c, tk=640, tm=None):
    """FC_PB_raw / FC_B / lin_trans_head fused on a single read of `pairs`."""
    w1a, b1a, w2a, b2a = params_a
    w1b, b1b, w2b, b2b = params_b
    w1c, b1c, w2c, b2c = params_c
    N, K = pairs.shape
    H = w1a.shape[1]
    dout = w2a.shape[1]
    assert K % tk == 0
    tm = _row_tile(N, tm)
    Np = _round_up(N, tm)
    xp = _pad_rows(pairs, Np)

    x_spec = pl.BlockSpec((tm, tk), lambda i, k: (i, k))
    w1_spec = pl.BlockSpec((tk, H), lambda i, k: (k, 0))
    full2 = lambda a: pl.BlockSpec(a.shape, lambda i, k: (0, 0))
    out_spec = pl.BlockSpec((tm, dout), lambda i, k: (i, 0))

    oa, ob, oc = pl.pallas_call(
        _pair_heads_kernel,
        out_shape=tuple(jax.ShapeDtypeStruct((Np, dout), jnp.bfloat16)
                        for _ in range(3)),
        grid=(Np // tm, K // tk),
        in_specs=[x_spec, w1_spec, w1_spec, w1_spec,
                  full2(b1a), full2(b1b), full2(b1c),
                  full2(w2a), full2(b2a), full2(w2b), full2(b2b),
                  full2(w2c), full2(b2c)],
        out_specs=(out_spec, out_spec, out_spec),
        scratch_shapes=[pltpu.VMEM((tm, H), jnp.float32)] * 3,
        compiler_params=_cparams(("parallel", "arbitrary")),
    )(xp, w1a, w1b, w1c, b1a, b1b, b1c, w2a, b2a, w2b, b2b, w2c, b2c)
    return oa[:N], ob[:N], oc[:N]


def _epilogue_kernel(fw_ref, fs_ref, braw_ref, fB_ref, fQ_ref,
                     wpba_ref, wpbb_ref, bpb_ref,
                     wp1_ref, wp2_ref, wp3_ref, bp_ref, o_ref):
    # Fused: guidance = f_w*f_s, b_I (FC_PB as VPU multiply+reduce, out dim 1),
    # f_BR = f_B*guidance, f_C = f_GQ (transformer stub), p_I = FC_P(cat).
    # Single lane-dense (tm, 128) store: p_I in lanes 0..28, b_I in lane 29.
    g = fw_ref[...].astype(jnp.float32) * fs_ref[...].astype(jnp.float32)
    braw = braw_ref[...].astype(jnp.float32)
    b_val = jnp.sum(braw * wpba_ref[...] + (braw * g) * wpbb_ref[...],
                    axis=-1, keepdims=True) + bpb_ref[...]        # (tm, 1)

    fB = fB_ref[...].astype(jnp.float32)
    fBR = fB * g
    fC = fQ_ref[...].astype(jnp.float32) * g  # TODO(synk): GTNet_Transformer undefined -> identity on f_GQ
    acc = jnp.dot(fB_ref[...], wp1_ref[...], preferred_element_type=jnp.float32)
    acc = acc + jnp.dot(fBR.astype(jnp.bfloat16), wp2_ref[...],
                        preferred_element_type=jnp.float32)
    acc = acc + jnp.dot(fC.astype(jnp.bfloat16), wp3_ref[...],
                        preferred_element_type=jnp.float32)
    acc = acc + bp_ref[...]                                       # cols 0..28 = p_I
    col = jax.lax.broadcasted_iota(jnp.int32, acc.shape, 1)
    o_ref[...] = jnp.where(col == 29, jnp.broadcast_to(b_val, acc.shape), acc)


def epilogue(f_w, f_s, b_raw, f_B, f_Q, params, tm=None):
    N, D = f_w.shape
    tm = _row_tile(N, tm)
    Np = _round_up(N, tm)
    fw, fs, br, fb, fq = (_pad_rows(a, Np) for a in (f_w, f_s, b_raw, f_B, f_Q))
    wpb_a, wpb_b, bpb = params["fc_pb"]
    wp1, wp2, wp3, bp = params["fc_p"]
    row_in = pl.BlockSpec((tm, D), lambda i: (i, 0))
    out = pl.pallas_call(
        _epilogue_kernel,
        out_shape=jax.ShapeDtypeStruct((Np, 128), jnp.float32),
        grid=(Np // tm,),
        in_specs=[row_in, row_in, row_in, row_in, row_in,
                  _full_spec(wpb_a), _full_spec(wpb_b), _full_spec(bpb),
                  _full_spec(wp1), _full_spec(wp2), _full_spec(wp3), _full_spec(bp)],
        out_specs=pl.BlockSpec((tm, 128), lambda i: (i, 0)),
        compiler_params=_cparams(),
    )(fw, fs, br, fb, fq, wpb_a, wpb_b, bpb, wp1, wp2, wp3, bp)
    return out[:N, :29], out[:N, 29:30]


# -----------------------------------------------------------------------------
# Glue ops (plain JAX): im2col, maxpool, pooling reshapes
# -----------------------------------------------------------------------------

def _im2col(x_nhwc, kh, kw):
    N, H, W, C = x_nhwc.shape
    oh, ow = H - kh + 1, W - kw + 1
    cols = []
    for dh in range(kh):
        for dw in range(kw):
            cols.append(x_nhwc[:, dh:dh + oh, dw:dw + ow, :])
    patches = jnp.concatenate(cols, axis=-1)        # (N, oh, ow, kh*kw*C)
    return patches.reshape(N * oh * ow, kh * kw * C), oh, ow


def _maxpool2x2(x_nhwc):
    N, H, W, C = x_nhwc.shape
    return x_nhwc.reshape(N, H // 2, 2, W // 2, 2, C).max(axis=(2, 4))


def conv_sp_map(union_box_nchw, p):
    """Conv(2->64,5x5) -> MaxPool2 -> Conv(64->32,5x5) -> MaxPool2 -> AdaptiveAvgPool(1,1).

    Channel dims are zero-padded to 128 lanes so every Pallas store is
    lane-dense; the conv1 output is sliced back to its 64 real channels before
    the second im2col so conv2's K is 1600 instead of 3200.
    TODO(synk): im2col stays in plain JAX; only the conv matmuls run as Pallas.
    """
    x = jnp.transpose(union_box_nchw, (0, 2, 3, 1)).astype(jnp.bfloat16)  # (N,32,32,2)
    N = x.shape[0]
    patches, oh, ow = _im2col(x, 5, 5)                          # (N*784, 50) bf16
    y = linear(patches, p["c1_w"], p["c1_b"], out_dtype=jnp.bfloat16)
    y = _maxpool2x2(y.reshape(N, oh, ow, 128))                  # (N,14,14,128)
    y = y[..., :64]                                             # real channels only
    patches2, oh2, ow2 = _im2col(y, 5, 5)                       # (N*100, 1600) bf16
    y = linear(patches2, p["c2_w"], p["c2_b"], out_dtype=jnp.bfloat16)
    y = _maxpool2x2(y.reshape(N, oh2, ow2, 128))                # (N,5,5,128)
    return jnp.mean(y.astype(jnp.float32), axis=(1, 2))         # (N,128), first 32 real


def backbone_stub(x_nchw, p, out_hw=10):
    # TODO(synk): pretrained resnet152[0:7] not loadable here; replaced by a
    # deterministic avg-pool to (10,10) + Pallas 1x1 projection 3 -> 1024 + ReLU.
    B, C, H, W = x_nchw.shape
    ph, pw = H // out_hw, W // out_hw
    x = x_nchw.reshape(B, C, out_hw, ph, out_hw, pw).mean(axis=(3, 5))   # (B,C,10,10)
    tok = jnp.transpose(x, (0, 2, 3, 1)).reshape(B * out_hw * out_hw, C)
    f = linear(tok, p["w"], p["b"], activation="relu", out_dtype=jnp.bfloat16)
    return f.reshape(B, out_hw * out_hw, p["w"].shape[1])        # (B, HW, 1024) bf16


# -----------------------------------------------------------------------------
# Parameter initialization (deterministic, synthetic)
# -----------------------------------------------------------------------------

def init_params(key, lin_size=1024, emb=600, out_size=512):
    keys = iter(jax.random.split(key, 160))

    def W(shape, scale=0.02):
        return (scale * jax.random.normal(next(keys), shape)).astype(jnp.float32)

    def bn_fold(c):
        gamma = 1.0 + 0.1 * jax.random.normal(next(keys), (c,))
        beta = 0.1 * jax.random.normal(next(keys), (c,))
        mean = 0.1 * jax.random.normal(next(keys), (c,))
        var = 1.0 + 0.1 * jnp.abs(jax.random.normal(next(keys), (c,)))
        scale = gamma / jnp.sqrt(var + 1e-5)
        shift = beta - mean * scale
        return (scale.reshape(1, c).astype(jnp.float32),
                shift.reshape(1, c).astype(jnp.float32))

    def resblock(C=1024, H=512):
        w1 = W((C, H)).astype(jnp.bfloat16); s1, b1 = bn_fold(H)
        w2 = W((H, H)).astype(jnp.bfloat16); s2, b2 = bn_fold(H)
        w3 = W((H, C)).astype(jnp.bfloat16); s3, b3 = bn_fold(C)
        return dict(w1=w1, s1=s1, b1=b1, w2=w2, s2=s2, b2=b2,
                    w3=w3, s3=s3, b3=b3)

    # conv_sp_map weights, zero-padded to 128 output channels; conv2 consumes
    # only the 64 real conv1 channels (K = 25*64 = 1600).
    c1_w = jnp.zeros((50, 128), jnp.float32).at[:, :64].set(W((50, 64)))
    c1_b = jnp.zeros((1, 128), jnp.float32).at[:, :64].set(W((1, 64)))
    c2_full = jnp.zeros((25, 64, 128), jnp.float32).at[:, :, :32].set(W((25, 64, 32)))
    c2_w = c2_full.reshape(25 * 64, 128)
    c2_b = jnp.zeros((1, 128), jnp.float32).at[:, :32].set(W((1, 32)))

    fs_w = jnp.zeros((128, out_size), jnp.float32).at[:32, :].set(W((32, out_size)))
    fs_b = W((1, out_size))

    # FC_W (600 -> 600 -> 512) padded to 640 lanes; padded rows/cols are zero so
    # the computation is exactly the 600-dim FC_block.
    embp = 640
    fw_w1 = jnp.zeros((embp, embp), jnp.float32).at[:emb, :emb].set(W((emb, emb)))
    fw_b1 = jnp.zeros((1, embp), jnp.float32).at[:, :emb].set(W((1, emb)))
    fw_w2 = jnp.zeros((embp, out_size), jnp.float32).at[:emb, :].set(W((emb, out_size)))
    fw_b2 = W((1, out_size))
    fc_w = (fw_w1.astype(jnp.bfloat16), fw_b1, fw_w2.astype(jnp.bfloat16), fw_b2)

    # Pair heads: padded pairs layout [f_H 1024 | f_O 1024 | f_G 1024 | locs 4 -> 128] = 3200.
    Kp = 3200

    def pb_head():   # FC_PB_raw / FC_B: real input dims 0..3075
        w1 = jnp.zeros((Kp, lin_size), jnp.float32).at[:3076, :].set(W((3076, lin_size)))
        return (w1.astype(jnp.bfloat16), W((1, lin_size)),
                W((lin_size, out_size)).astype(jnp.bfloat16), W((1, out_size)))

    fc_pb_raw = pb_head()
    fc_b = pb_head()

    # lin_trans_head consumes pairs_only = [f_H | f_O | locs]: f_G rows are zero.
    lt_w1 = jnp.zeros((Kp, lin_size), jnp.float32)
    lt_w1 = lt_w1.at[:2048, :].set(W((2048, lin_size)))
    lt_w1 = lt_w1.at[3072:3076, :].set(W((4, lin_size)))
    lin_trans = (lt_w1.astype(jnp.bfloat16), W((1, lin_size)),
                 W((lin_size, out_size)).astype(jnp.bfloat16), W((1, out_size)))

    # FC_PB (Linear 1024 -> 1) as VPU multiply+reduce rows.
    pb_w = W((out_size * 2, 1))
    wpb_a = pb_w[:out_size, 0].reshape(1, out_size)
    wpb_b = pb_w[out_size:, 0].reshape(1, out_size)
    bpb = W((1, 1))

    # FC_P (Linear 1536 -> 29), padded to 128 output lanes, split per input chunk.
    fp_pad = jnp.zeros((out_size * 3, 128), jnp.float32).at[:, :29].set(W((out_size * 3, 29)))
    wp1 = fp_pad[:out_size].astype(jnp.bfloat16)
    wp2 = fp_pad[out_size:2 * out_size].astype(jnp.bfloat16)
    wp3 = fp_pad[2 * out_size:].astype(jnp.bfloat16)
    bp = jnp.zeros((1, 128), jnp.float32).at[:, :29].set(W((1, 29)))

    params = {
        "backbone": {"w": W((3, lin_size)).astype(jnp.bfloat16), "b": W((1, lin_size))},
        "res_people": resblock(),
        "res_obj": resblock(),
        "res_context": resblock(),
        "conv_sp": {"c1_w": c1_w.astype(jnp.bfloat16), "c1_b": c1_b,
                    "c2_w": c2_w.astype(jnp.bfloat16), "c2_b": c2_b},
        "fc_s": (fs_w.astype(jnp.bfloat16), fs_b),
        "fc_w": fc_w,
        "fc_pb_raw": fc_pb_raw,
        "fc_pb": (wpb_a, wpb_b, bpb),
        "fc_b": fc_b,
        "lin_trans_head": lin_trans,
        "fc_p": (wp1, wp2, wp3, bp),
    }
    return params


# -----------------------------------------------------------------------------
# GTNet forward
# -----------------------------------------------------------------------------

def gtnet_forward(params, x, pairs_info, spatial_locs, union_box, objects_embed,
                  noise_key):
    B = len(pairs_info)
    people_per_img = [int(pi[0]) for pi in pairs_info]
    objects_per_img = [int(pi[1]) for pi in pairs_info]

    # Backbone feature map F as channel-last tokens: (B, HW, 1024) bf16.
    F_tokens = backbone_stub(x, params["backbone"])

    # TODO(synk): ROI.get_pool_loc not provided -> ROI stand-in: each person /
    # object ROI is the full-image feature map plus a tiny deterministic jitter.
    kp, ko = jax.random.split(noise_key)
    p_img = np.repeat(np.arange(B), people_per_img)
    o_img = np.repeat(np.arange(B), objects_per_img)
    rois_people = (F_tokens[p_img] + 0.01 * jax.random.normal(
        kp, (len(p_img),) + F_tokens.shape[1:], jnp.float32)).astype(jnp.bfloat16)
    rois_objects = (F_tokens[o_img] + 0.01 * jax.random.normal(
        ko, (len(o_img),) + F_tokens.shape[1:], jnp.float32)).astype(jnp.bfloat16)

    # Residual blocks + average pooling + flatten (fused Pallas kernels), bf16 out.
    f_H = resblock_pool(rois_people, params["res_people"])      # (P_total, 1024)
    f_O = resblock_pool(rois_objects, params["res_obj"])        # (O_total, 1024)
    f_G = resblock_pool(F_tokens, params["res_context"])        # (B, 1024)

    # Spatial-map and word-embedding guidance streams.
    sp = conv_sp_map(union_box, params["conv_sp"])               # (N_pairs, 128)
    f_s = linear(sp, params["fc_s"][0], params["fc_s"][1],
                 activation="relu", out_dtype=jnp.bfloat16)      # (N_pairs, 512)
    emb_pad = jnp.zeros((objects_embed.shape[0], 640), objects_embed.dtype
                        ).at[:, :600].set(objects_embed)
    f_w = fc_block(emb_pad, params["fc_w"], out_dtype=jnp.bfloat16)  # (N_pairs, 512)

    # TODO(synk): ROI.pairing not provided -> all person x object pairs per image,
    # built with vectorized gathers (static index arrays).
    p_idx, o_idx, img_idx = [], [], []
    p_off = o_off = 0
    for b in range(B):
        for p_i in range(people_per_img[b]):
            for o_i in range(objects_per_img[b]):
                p_idx.append(p_off + p_i)
                o_idx.append(o_off + o_i)
                img_idx.append(b)
        p_off += people_per_img[b]
        o_off += objects_per_img[b]
    p_idx = np.asarray(p_idx, np.int32)
    o_idx = np.asarray(o_idx, np.int32)
    img_idx = np.asarray(img_idx, np.int32)

    locs_pad = jnp.zeros((spatial_locs.shape[0], 128), jnp.float32
                         ).at[:, :4].set(spatial_locs).astype(jnp.bfloat16)
    pairs = jnp.concatenate([f_H[p_idx], f_O[o_idx], f_G[img_idx], locs_pad],
                            axis=1)                              # (N_pairs, 3200) bf16

    # FC_PB_raw / FC_B / lin_trans_head fused: `pairs` is read once from HBM;
    # lin_trans_head's weight rows for the f_G chunk are zero (== pairs_only).
    b_I_raw, f_B, f_Q = pair_heads(pairs, params["fc_pb_raw"], params["fc_b"],
                                   params["lin_trans_head"])

    # TODO(synk): GTNet_Transformer definition not provided; identity stand-in,
    # so f_C == f_GQ and the per-image loop collapses into the fused epilogue.
    p_I, b_I = epilogue(f_w, f_s, b_I_raw, f_B, f_Q, params)
    return [p_I, b_I]


# -----------------------------------------------------------------------------
# Main
# -----------------------------------------------------------------------------

if __name__ == "__main__":
    key = jax.random.PRNGKey(0)
    k_params, k_x, k_sl, k_ub, k_emb, k_noise = jax.random.split(key, 6)

    params = init_params(k_params)

    # Small deterministic inputs.
    B = 2
    pairs_info = [(1, 2), (1, 2)]          # (people, objects) per image -> 4 pairs total
    n_pairs = sum(p * o for p, o in pairs_info)

    x = jax.random.normal(k_x, (B, 3, 40, 40), dtype=jnp.float32)          # image batch (NCHW)
    spatial_locs = jax.random.uniform(k_sl, (n_pairs, 4), dtype=jnp.float32)
    union_box = jax.random.normal(k_ub, (n_pairs, 2, 32, 32), dtype=jnp.float32)
    objects_embed = jax.random.normal(k_emb, (n_pairs, 600), dtype=jnp.float32)

    p_I, b_I = gtnet_forward(params, x, pairs_info, spatial_locs,
                             union_box, objects_embed, k_noise)
    jax.block_until_ready(p_I)
    jax.block_until_ready(b_I)

    assert p_I.shape == (n_pairs, 29) and b_I.shape == (n_pairs, 1)
    assert bool(jnp.all(jnp.isfinite(p_I))) and bool(jnp.all(jnp.isfinite(b_I)))
    print("KERNEL_OK")
</pallas_src>

<mosaic_0001>
module attributes {stable_mosaic.version = 11 : i64} {
  func.func @kernel(%arg0: i32, %arg1: memref<112x3xf32, #tpu.memory_space<vmem>>, %arg2: memref<3x1024xbf16, #tpu.memory_space<vmem>>, %arg3: memref<1x1024xf32, #tpu.memory_space<vmem>>, %arg4: memref<112x1024xbf16, #tpu.memory_space<vmem>>) attributes {dimension_semantics = [#tpu.dimension_semantics<parallel>], iteration_bounds = array<i64: 2>, scalar_prefetch = 0 : i64, scratch_operands = 0 : i64, tpu.core_type = #tpu.core_type<tc>, window_params = [{transform_indices = @transform_0, window_bounds = array<i64: 112, 3>}, {pipeline_mode = #tpu.pipeline_mode<synchronous>, transform_indices = @transform_1, window_bounds = array<i64: 3, 1024>}, {pipeline_mode = #tpu.pipeline_mode<synchronous>, transform_indices = @transform_2, window_bounds = array<i64: 1, 1024>}, {transform_indices = @transform_3, window_bounds = array<i64: 112, 1024>}]} {
    %c0 = arith.constant 0 : index
    %c0_0 = arith.constant 0 : index
    %0 = vector.load %arg1[%c0, %c0_0] : memref<112x3xf32, #tpu.memory_space<vmem>>, vector<112x3xf32>
    %1 = arith.truncf %0 : vector<112x3xf32> to vector<112x3xbf16>
    %c0_1 = arith.constant 0 : index
    %c0_2 = arith.constant 0 : index
    %2 = vector.load %arg2[%c0_1, %c0_2] : memref<3x1024xbf16, #tpu.memory_space<vmem>>, vector<3x1024xbf16>
    %cst = arith.constant dense<0.000000e+00> : vector<112x1024xf32>
    %3 = tpu.matmul %1, %2, %cst {dimension_numbers = #tpu.dot_dimension_numbers<[1], [0], [0], [1], [0, 0, 1, 1], [], []>} : vector<112x3xbf16>, vector<3x1024xbf16>, vector<112x1024xf32> -> vector<112x1024xf32>
    %c0_3 = arith.constant 0 : index
    %c0_4 = arith.constant 0 : index
    %4 = vector.load %arg3[%c0_3, %c0_4] : memref<1x1024xf32, #tpu.memory_space<vmem>>, vector<1x1024xf32>
    %5 = vector.broadcast %4 : vector<1x1024xf32> to vector<112x1024xf32>
    %6 = arith.addf %3, %5 : vector<112x1024xf32>
    %cst_5 = arith.constant 0.000000e+00 : f32
    %7 = vector.broadcast %cst_5 : f32 to vector<112x1024xf32>
    %8 = arith.maximumf %6, %7 : vector<112x1024xf32>
    %9 = arith.truncf %8 : vector<112x1024xf32> to vector<112x1024xbf16>
    %c0_6 = arith.constant 0 : index
    %c0_7 = arith.constant 0 : index
    %10 = vector.load %arg4[%c0_6, %c0_7] : memref<112x1024xbf16, #tpu.memory_space<vmem>>, vector<112x1024xbf16>
    tpu.vector_store %arg4[%c0_6, %c0_7], %9 {strides = array<i32>} : memref<112x1024xbf16, #tpu.memory_space<vmem>>, vector<112x1024xbf16>,
    return
  }
  func.func @transform_0(%arg0: i32) -> (i32, i32) {
    %c0_i32 = arith.constant 0 : i32
    %c0_i32_0 = arith.constant 0 : i32
    return %arg0, %c0_i32 : i32, i32
  }
  func.func @transform_1(%arg0: i32) -> (i32, i32) {
    %c0_i32 = arith.constant 0 : i32
    %c0_i32_0 = arith.constant 0 : i32
    %c0_i32_1 = arith.constant 0 : i32
    return %c0_i32, %c0_i32_0 : i32, i32
  }
  func.func @transform_2(%arg0: i32) -> (i32, i32) {
    %c0_i32 = arith.constant 0 : i32
    %c0_i32_0 = arith.constant 0 : i32
    %c0_i32_1 = arith.constant 0 : i32
    return %c0_i32, %c0_i32_0 : i32, i32
  }
  func.func @transform_3(%arg0: i32) -> (i32, i32) {
    %c0_i32 = arith.constant 0 : i32
    %c0_i32_0 = arith.constant 0 : i32
    return %arg0, %c0_i32 : i32, i32
  }
}

</mosaic_0001>

<llo_original>
// kernel: tpu_custom_call.1
$region0: #{tpu_custom_call.1}
  #allocation0 [shape = 'u32[]', space=smem, size = 0x4, offset = 0x4, fixed_abs, tag = 'smem constant byte address 0x4 - core index']
  #allocation1 [shape = 'u32[144,128]{1,0:T(1,128)}', space=vmem, size = 0x12000, scoped, tag = 'internal scratch']
  %s0 = inlined_call_operand.vmem [shape: f32[224,3], index: 0, kind: input, shape index: {}]
  %s1 = inlined_call_operand.vmem [shape: bf16[3,1024], index: 1, kind: input, shape index: {}]
  %s2 = inlined_call_operand.vmem [shape: f32[1,1024], index: 2, kind: input, shape index: {}]
  %s3 = inlined_call_operand.hbm [shape: bf16[224,1024], index: 3, kind: output, shape index: {}]
  %s4 = sld [smem:[#allocation0]]
  $region45: #{tpu_custom_call.1} parent=0
    _
  %s6 = ssub.s32 1, %s4
  %s7 = scalar_select 0, %s6, %s4
  $region1: #{tpu_custom_call.1} parent=0
    #allocation2 [shape = 'u8[458752]{0}', space=vmem, size = 0x70000, scoped, tag = 'output window, operand 0']
    #allocation3 [shape = 's32[2]{0}', space=sflag, size = 0x8, scoped, tag = 'scoped memory for tpu_custom_call.1']
    %8 = vsyncpa [#allocation3], 0
    %s9 = scalar_lea.sflag [#allocation3], 1
    %10 = vsyncpa %s9, 0
    loop: start=0, step=1, limit=4
    $region2: #{tpu_custom_call.1} parent=1 // loop_pre_header
      _
    $region3: #{tpu_custom_call.1} parent=1 // loop_header
      %s12 = sphi 0, %s16
      %p13 = scmp.ge.s32.totalorder %s12, 4
      %s22 = sphi 0, %s24
      %s25 = sphi 0, %s22
      %s26 = sphi 0, %s25
      %s42 = sphi 0, %s26
      %s46 = sphi 0, %s46
      %s48 = sphi 0, %s46
      %s49 = sphi 0, %s48
      %s63 = sphi 0, %s49
      %s67 = sphi 0, %s67
      %s69 = sphi 0, %s67
      %s70 = sphi 0, %s69
      %s84 = sphi 0, %s70
      %s90 = sphi 0, %s92
      %s93 = sphi 0, %s90
      %s94 = sphi 0, %s93
      %s110 = sphi 0, %s94
    $region4: #{tpu_custom_call.1} parent=1 // loop_header_branch
      %15 = sbr.rel (%p13) target = $region8
    $region5: #{tpu_custom_call.1} parent=1 // loop_body
      %s17 = ssub.s32 %s12, 1
      %s18 = ssub.s32 %s12, 2
      %s19 = sadd.s32 %s12, 1
      %s20 = ssub.s32 %s12, %s19
      %p21 = scmp.eq.s32.totalorder %s20, 0
      %s23 = sadd.s32 %s22, 1
      %s24 = scalar_select %p21, %s22, %s23
      %p27 = pneg %p21
      %p28 = scmp.eq.s32.totalorder %s12, 1
      %p29 = por %p27, %p28
      %p30 = scmp.ne.s32.totalorder %s22, %s25
      %p31 = scmp.eq.s32.totalorder %s12, 0
      %p32 = por %p30, %p31
      %p33 = scmp.ne.s32.totalorder %s22, %s25
      %p34 = scmp.eq.s32.totalorder %s17, 1
      %p35 = por %p33, %p34
      %p36 = scmp.ne.s32.totalorder %s25, %s26
      %p37 = scmp.eq.s32.totalorder %s17, 0
      %p38 = por %p36, %p37
      %p39 = scmp.ne.s32.totalorder %s25, %s26
      %p40 = scmp.eq.s32.totalorder %s18, 1
      %p41 = por %p39, %p40
      %p43 = scmp.ne.s32.totalorder %s26, %s42
      %p44 = scmp.eq.s32.totalorder %s18, 0
      %p45 = por %p43, %p44
      %s47 = sadd.s32 %s46, 1
      %p50 = scmp.eq.s32.totalorder %s12, 1
      %p51 = scmp.ne.s32.totalorder %s46, %s48
      %p52 = scmp.eq.s32.totalorder %s12, 0
      %p53 = por %p51, %p52
      %p54 = scmp.ne.s32.totalorder %s46, %s48
      %p55 = scmp.eq.s32.totalorder %s17, 1
      %p56 = por %p54, %p55
      %p57 = scmp.ne.s32.totalorder %s48, %s49
      %p58 = scmp.eq.s32.totalorder %s17, 0
      %p59 = por %p57, %p58
      %p60 = scmp.ne.s32.totalorder %s48, %s49
      %p61 = scmp.eq.s32.totalorder %s18, 1
      %p62 = por %p60, %p61
      %p64 = scmp.ne.s32.totalorder %s49, %s63
      %p65 = scmp.eq.s32.totalorder %s18, 0
      %p66 = por %p64, %p65
      %s68 = sadd.s32 %s67, 1
      %p71 = scmp.eq.s32.totalorder %s12, 1
      %p72 = scmp.ne.s32.totalorder %s67, %s69
      %p73 = scmp.eq.s32.totalorder %s12, 0
      %p74 = por %p72, %p73
      %p75 = scmp.ne.s32.totalorder %s67, %s69
      %p76 = scmp.eq.s32.totalorder %s17, 1
      %p77 = por %p75, %p76
      %p78 = scmp.ne.s32.totalorder %s69, %s70
      %p79 = scmp.eq.s32.totalorder %s17, 0
      %p80 = por %p78, %p79
      %p81 = scmp.ne.s32.totalorder %s69, %s70
      %p82 = scmp.eq.s32.totalorder %s18, 1
      %p83 = por %p81, %p82
      %p85 = scmp.ne.s32.totalorder %s70, %s84
      %p86 = scmp.eq.s32.totalorder %s18, 0
      %p87 = por %p85, %p86
      %s88 = ssub.s32 %s12, %s19
      %p89 = scmp.eq.s32.totalorder %s88, 0
      %s91 = sadd.s32 %s90, 1
      %s92 = scalar_select %p89, %s90, %s91
      %p95 = pneg %p89
      %p96 = scmp.eq.s32.totalorder %s12, 1
      %p97 = por %p95, %p96
      %p98 = scmp.ne.s32.totalorder %s90, %s93
      %p99 = scmp.eq.s32.totalorder %s12, 0
      %p100 = por %p98, %p99
      %p101 = scmp.ne.s32.totalorder %s90, %s93
      %p102 = scmp.eq.s32.totalorder %s17, 1
      %p103 = por %p101, %p102
      %p104 = scmp.ne.s32.totalorder %s93, %s94
      %p105 = scmp.eq.s32.totalorder %s17, 0
      %p106 = por %p104, %p105
      %p107 = scmp.ne.s32.totalorder %s93, %s94
      %p108 = scmp.eq.s32.totalorder %s18, 1
      %p109 = por %p107, %p108
      %p111 = scmp.ne.s32.totalorder %s94, %s110
      %p112 = scmp.eq.s32.totalorder %s18, 0
      %p113 = por %p111, %p112
      %p114 = scmp.le.s32.totalorder 1, %s12
      %p115 = scmp.lt.s32.totalorder %s12, 3
      %p116 = pnand %p114, %p115
      %p117 = pneg %p116
      // Predicated region
      $region9: #{tpu_custom_call.1} parent=5 // pred_check
        _
      $region10: #{tpu_custom_call.1} parent=5 // pred_check_branch
        %119 = sbr.rel (%p116) target = $region12
      $region11: #{tpu_custom_call.1} parent=5 // pred_region
        %s120 = ssub.s32 %s12, 1
        // Predicated region
        $region13: #{tpu_custom_call.1} parent=11 // pred_check
          %p121 = pneg %p59
        $region14: #{tpu_custom_call.1} parent=11 // pred_check_branch
          %123 = sbr.rel (%p121) target = $region16
        $region15: #{tpu_custom_call.1} parent=11 // pred_region
          _
        $region16: #{tpu_custom_call.1} parent=11 // pred_fallthru
          _
        // Predicated region
        $region17: #{tpu_custom_call.1} parent=11 // pred_check
          %p124 = pneg %p80
        $region18: #{tpu_custom_call.1} parent=11 // pred_check_branch
          %126 = sbr.rel (%p124) target = $region20
        $region19: #{tpu_custom_call.1} parent=11 // pred_region
          _
        $region20: #{tpu_custom_call.1} parent=11 // pred_fallthru
          _
      $region12: #{tpu_custom_call.1} parent=5 // pred_fallthru
        _
      %p127 = scmp.lt.s32.totalorder %s12, 2
      // Predicated region
      $region21: #{tpu_custom_call.1} parent=5 // pred_check
        %p128 = pneg %p127
      $region22: #{tpu_custom_call.1} parent=5 // pred_check_branch
        %130 = sbr.rel (%p128) target = $region24
      $region23: #{tpu_custom_call.1} parent=5 // pred_region
        // Predicated region
        $region25: #{tpu_custom_call.1} parent=23 // pred_check
          %p131 = pneg %p32
        $region26: #{tpu_custom_call.1} parent=23 // pred_check_branch
          %133 = sbr.rel (%p131) target = $region28
        $region27: #{tpu_custom_call.1} parent=23 // pred_region
          %s134 = smul.u32 14, %s12
          %p135 = scmp.lt.s32.totalorder %s134, 27
          %s136 = scalar_select %p135, %s134, 27
          %s137 = smul.addr %s136, 8
          %s138 = scalar_lea.vmem %s0, %s137
          %s139 = smul.u32 14, %s12
        $region28: #{tpu_custom_call.1} parent=23 // pred_fallthru
          _
      $region24: #{tpu_custom_call.1} parent=5 // pred_fallthru
        _
      %p140 = scmp.le.s32.totalorder 1, %s12
      %p141 = scmp.lt.s32.totalorder %s12, 3
      %p142 = pnand %p140, %p141
      %p143 = pneg %p142
      // Predicated region
      $region29: #{tpu_custom_call.1} parent=5 // pred_check
        _
      $region30: #{tpu_custom_call.1} parent=5 // pred_check_branch
        %145 = sbr.rel (%p142) target = $region32
      $region31: #{tpu_custom_call.1} parent=5 // pred_region
        %s146 = ssub.s32 %s12, 1
        %s147 = smul.u32 14, %s17
        %p148 = scmp.lt.s32.totalorder %s147, 27
        %s149 = scalar_select %p148, %s147, 27
        %s150 = smul.addr %s149, 8
        %s151 = scalar_lea.vmem %s0, %s150
        %p152 = pneg %p38
        %p153 = pneg %p35
        %p154 = pneg %p59
        %p155 = pneg %p56
        %p156 = pneg %p80
        %p157 = pneg %p77
        %p158 = pneg %p106
        %p159 = pneg %p103
        %s160 = sand.u32 %s93, 1
        %s161 = scalar_lea.sflag [#allocation3], %s160
        %s162 = sand.u32 %s93, 1
        %s163 = smul.addr %s162, 448
        %s164 = scalar_lea.vmem [#allocation2], %s163
        %s165 = smul.u32 14, %s17
        %p166 = scmp.lt.s32.totalorder %s165, 27
        %s167 = scalar_select %p166, %s165, 27
        %s168 = smul.addr %s167, 8
        %s169 = scalar_lea.vmem %s0, %s168
        %s170 = smul.u32 14, %s17
        %s171 = smul.u32 14, %s17
        %v173 = vld [vmem:[%s169] sm:$0xff]
        %v174 = vld [vmem:[%s169 + $0x8] sm:$0xff]
        %v175 = vld [vmem:[%s169 + $0x10] sm:$0xff]
        %v176 = vld [vmem:[%s169 + $0x18] sm:$0xff]
        %v177 = vld [vmem:[%s169 + $0x20] sm:$0xff]
        %v178 = vld [vmem:[%s169 + $0x28] sm:$0xff]
        %v179 = vld [vmem:[%s169 + $0x30] sm:$0xff]
        %v180 = vld [vmem:[%s169 + $0x38] sm:$0xff]
        %v181 = vld [vmem:[%s169 + $0x40] sm:$0xff]
        %v182 = vld [vmem:[%s169 + $0x48] sm:$0xff]
        %v183 = vld [vmem:[%s169 + $0x50] sm:$0xff]
        %v184 = vld [vmem:[%s169 + $0x58] sm:$0xff]
        %v185 = vld [vmem:[%s169 + $0x60] sm:$0xff]
        %v186 = vld [vmem:[%s169 + $0x68] sm:$0xff]
        %v187 = vpack.c.bf16 %v174, %v173
        %v188 = vpack.c.bf16 %v176, %v175
        %v189 = vpack.c.bf16 %v178, %v177
        %v190 = vpack.c.bf16 %v180, %v179
        %v191 = vpack.c.bf16 %v182, %v181
        %v192 = vpack.c.bf16 %v184, %v183
        %v193 = vpack.c.bf16 %v186, %v185
        %v194 = vld [vmem:[%s1] sm:$0xff]
        %v195 = vld [vmem:[%s1 + $0x8] sm:$0xff]
        %v196 = vld [vmem:[%s2] sm:$0xff]
        %v198 = vlaneseq
        %v199 = vshrl.u32 %v198, 7
        %v200 = vsub.s32 0, %v199
        %v201 = vrot.slane %v196, %v200
        %v202 = vlaneseq
        %v203 = vshrl.u32 %v202, 7
        %v204 = vsub.s32 1, %v203
        %v205 = vrot.slane %v196, %v204
        %v206 = vlaneseq
        %v207 = vshrl.u32 %v206, 7
        %v208 = vsub.s32 2, %v207
        %v209 = vrot.slane %v196, %v208
        %v210 = vlaneseq
        %v211 = vshrl.u32 %v210, 7
        %v212 = vsub.s32 3, %v211
        %v213 = vrot.slane %v196, %v212
        %v214 = vlaneseq
        %v215 = vshrl.u32 %v214, 7
        %v216 = vsub.s32 4, %v215
        %v217 = vrot.slane %v196, %v216
        %v218 = vlaneseq
        %v219 = vshrl.u32 %v218, 7
        %v220 = vsub.s32 5, %v219
        %v221 = vrot.slane %v196, %v220
        %v222 = vlaneseq
        %v223 = vshrl.u32 %v222, 7
        %v224 = vsub.s32 6, %v223
        %v225 = vrot.slane %v196, %v224
        %v226 = vlaneseq
        %v227 = vshrl.u32 %v226, 7
        %v228 = vsub.s32 7, %v227
        %v229 = vrot.slane %v196, %v228
        %v240 = vcombine.high %v194, %v194
        %v242 = vunpack.c.l.s4 1983009808
        %v243 = vunpack.c.0.s8 %v242
        %v244 = vlaneseq
        %v245 = vshrl.u32 %v244, 7
        %v246 = vsub.s32 %v243, %v245
        %v247 = vrot.slane %v194, %v246
        %v249 = vunpack.c.l.s4 1983009808
        %v250 = vunpack.c.0.s8 %v249
        %v251 = vlaneseq
        %v252 = vshrl.u32 %v251, 7
        %v253 = vsub.s32 %v250, %v252
        %v254 = vrot.slane %v240, %v253
        %v255 = vcombine.high %v247, %v247
        %v256 = vcombine.high %v254, %v254
        %v257 = vcombine.high %v195, %v195
        %v259 = vunpack.c.l.s4 1983009808
        %v260 = vunpack.c.0.s8 %v259
        %v261 = vlaneseq
        %v262 = vshrl.u32 %v261, 7
        %v263 = vsub.s32 %v260, %v262
        %v264 = vrot.slane %v195, %v263
        %v266 = vunpack.c.l.s4 1983009808
        %v267 = vunpack.c.0.s8 %v266
        %v268 = vlaneseq
        %v269 = vshrl.u32 %v268, 7
        %v270 = vsub.s32 %v267, %v269
        %v271 = vrot.slane %v257, %v270
        %v272 = vcombine.high %v264, %v264
        %v273 = vcombine.high %v271, %v271
        %vm274 = vcmask 23552
        %v276 = vsel %vm274, %v187, 0
        %v279 = vsel %vm274, %v188, 0
        %v282 = vsel %vm274, %v189, 0
        %v285 = vsel %vm274, %v190, 0
        %v288 = vsel %vm274, %v191, 0
        %v291 = vsel %vm274, %v192, 0
        %v294 = vsel %vm274, %v193, 0
        %vm296 = vcmask 1040384
        %vm297 = vcmask 1041408
        %v298 = vsel %vm296, 4294967295, 65535
        %v299 = vsel %vm297, %v298, 0
        %v301 = vand.u32 %v247, %v299
        %v304 = vand.u32 %v255, %v299
        %v307 = vand.u32 %v254, %v299
        %v310 = vand.u32 %v256, %v299
        %v313 = vand.u32 %v264, %v299
        %v316 = vand.u32 %v272, %v299
        %v319 = vand.u32 %v271, %v299
        %v322 = vand.u32 %v273, %v299
        %324 = vmatprep.subr.bf16.mxu0 %v304
        %325 = vmatpush1.bf16.msra.mxu0 %v301
        %326 = vmatprep.subr.bf16.mxu0 0
        %327 = vmatpush1.bf16.msra.mxu0 0
        %328 = vmatprep.subr.bf16.mxu0 0
        %329 = vmatpush1.bf16.msra.mxu0 0
        %330 = vmatprep.subr.bf16.mxu0 0
        %331 = vmatpush1.bf16.msra.mxu0 0
        %332 = vmatprep.subr.bf16.mxu0 0
        %333 = vmatpush1.bf16.msra.mxu0 0
        %334 = vmatprep.subr.bf16.mxu0 0
        %335 = vmatpush1.bf16.msra.mxu0 0
        %336 = vmatprep.subr.bf16.mxu0 0
        %337 = vmatpush1.bf16.msra.mxu0 0
        %338 = vmatprep.subr.bf16.mxu0 0
        %339 = vmatpush1.bf16.msra.mxu0 0
        %340 = vmatprep.subr.bf16.mxu0 0
        %341 = vmatpush1.bf16.msra.mxu0 0
        %342 = vmatprep.subr.bf16.mxu0 0
        %343 = vmatpush1.bf16.msra.mxu0 0
        %344 = vmatprep.subr.bf16.mxu0 0
        %345 = vmatpush1.bf16.msra.mxu0 0
        %346 = vmatprep.subr.bf16.mxu0 0
        %347 = vmatpush1.bf16.msra.mxu0 0
        %348 = vmatprep.subr.bf16.mxu0 0
        %349 = vmatpush1.bf16.msra.mxu0 0
        %350 = vmatprep.subr.bf16.mxu0 0
        %351 = vmatpush1.bf16.msra.mxu0 0
        %352 = vmatprep.subr.bf16.mxu0 0
        %353 = vmatpush1.bf16.msra.mxu0 0
        %354 = vmatprep.subr.bf16.mxu0 0
        %355 = vmatpush1.bf16.msra.mxu0 0
        %356 = vmatprep.mubr.bf16.mxu0 0
        %357 = vmatmul.mubr.bf16.gmra.mrb[0].mxu0 %v276
        %v358 = vpop.f32.mrb[0].mxu0
        %v359 = vadd.f32 %v201, %v358
        %v360 = vpop.f32.mrb[0].mxu0
        %v361 = vadd.f32 %v205, %v360
        %v362 = vpop.f32.mrb[0].mxu0
        %v363 = vadd.f32 %v201, %v362
        %v364 = vpop.f32.mrb[0].mxu0
        %v365 = vadd.f32 %v205, %v364
        %366 = vmatprep.mubr.bf16.mxu0 0
        %367 = vmatmul.mubr.bf16.gmra.mrb[0].mxu0 %v279
        %v368 = vpop.f32.mrb[0].mxu0
        %v369 = vadd.f32 %v201, %v368
        %v370 = vpop.f32.mrb[0].mxu0
        %v371 = vadd.f32 %v205, %v370
        %v372 = vpop.f32.mrb[0].mxu0
        %v373 = vadd.f32 %v201, %v372
        %v374 = vpop.f32.mrb[0].mxu0
        %v375 = vadd.f32 %v205, %v374
        %376 = vmatprep.mubr.bf16.mxu0 0
        %377 = vmatmul.mubr.bf16.gmra.mrb[0].mxu0 %v282
        %v378 = vpop.f32.mrb[0].mxu0
        %v379 = vadd.f32 %v201, %v378
        %v380 = vpop.f32.mrb[0].mxu0
        %v381 = vadd.f32 %v205, %v380
        %v382 = vpop.f32.mrb[0].mxu0
        %v383 = vadd.f32 %v201, %v382
        %v384 = vpop.f32.mrb[0].mxu0
        %v385 = vadd.f32 %v205, %v384
        %386 = vmatprep.mubr.bf16.mxu0 0
        %387 = vmatmul.mubr.bf16.gmra.mrb[0].mxu0 %v285
        %v388 = vpop.f32.mrb[0].mxu0
        %v389 = vadd.f32 %v201, %v388
        %v390 = vpop.f32.mrb[0].mxu0
        %v391 = vadd.f32 %v205, %v390
        %v392 = vpop.f32.mrb[0].mxu0
        %v393 = vadd.f32 %v201, %v392
        %v394 = vpop.f32.mrb[0].mxu0
        %v395 = vadd.f32 %v205, %v394
        %396 = vmatprep.mubr.bf16.mxu0 0
        %397 = vmatmul.mubr.bf16.gmra.mrb[0].mxu0 %v288
        %v398 = vpop.f32.mrb[0].mxu0
        %v399 = vadd.f32 %v201, %v398
        %v400 = vpop.f32.mrb[0].mxu0
        %v401 = vadd.f32 %v205, %v400
        %v402 = vpop.f32.mrb[0].mxu0
        %v403 = vadd.f32 %v201, %v402
        %v404 = vpop.f32.mrb[0].mxu0
        %v405 = vadd.f32 %v205, %v404
        %406 = vmatprep.mubr.bf16.mxu0 0
        %407 = vmatmul.mubr.bf16.gmra.mrb[0].mxu0 %v291
        %v408 = vpop.f32.mrb[0].mxu0
        %v409 = vadd.f32 %v201, %v408
        %v410 = vpop.f32.mrb[0].mxu0
        %v411 = vadd.f32 %v205, %v410
        %v412 = vpop.f32.mrb[0].mxu0
        %v413 = vadd.f32 %v201, %v412
        %v414 = vpop.f32.mrb[0].mxu0
        %v415 = vadd.f32 %v205, %v414
        %416 = vmatprep.mubr.bf16.mxu0 0
        %417 = vmatmul.mubr.bf16.gmra.mrb[0].mxu0 %v294
        %v418 = vpop.f32.mrb[0].mxu0
        %v419 = vadd.f32 %v201, %v418
        %v420 = vpop.f32.mrb[0].mxu0
        %v421 = vadd.f32 %v205, %v420
        %v422 = vpop.f32.mrb[0].mxu0
        %v423 = vadd.f32 %v201, %v422
        %v424 = vpop.f32.mrb[0].mxu0
        %v425 = vadd.f32 %v205, %v424
        %426 = vdwg.mxu0
        %427 = vmatprep.subr.bf16.mxu0 %v310
        %428 = vmatpush1.bf16.msra.mxu0 %v307
        %429 = vmatprep.subr.bf16.mxu0 0
        %430 = vmatpush1.bf16.msra.mxu0 0
        %431 = vmatprep.subr.bf16.mxu0 0
        %432 = vmatpush1.bf16.msra.mxu0 0
        %433 = vmatprep.subr.bf16.mxu0 0
        %434 = vmatpush1.bf16.msra.mxu0 0
        %435 = vmatprep.subr.bf16.mxu0 0
        %436 = vmatpush1.bf16.msra.mxu0 0
        %437 = vmatprep.subr.bf16.mxu0 0
        %438 = vmatpush1.bf16.msra.mxu0 0
        %439 = vmatprep.subr.bf16.mxu0 0
        %440 = vmatpush1.bf16.msra.mxu0 0
        %441 = vmatprep.subr.bf16.mxu0 0
        %442 = vmatpush1.bf16.msra.mxu0 0
        %443 = vmatprep.subr.bf16.mxu0 0
        %444 = vmatpush1.bf16.msra.mxu0 0
        %445 = vmatprep.subr.bf16.mxu0 0
        %446 = vmatpush1.bf16.msra.mxu0 0
        %447 = vmatprep.subr.bf16.mxu0 0
        %448 = vmatpush1.bf16.msra.mxu0 0
        %449 = vmatprep.subr.bf16.mxu0 0
        %450 = vmatpush1.bf16.msra.mxu0 0
        %451 = vmatprep.subr.bf16.mxu0 0
        %452 = vmatpush1.bf16.msra.mxu0 0
        %453 = vmatprep.subr.bf16.mxu0 0
        %454 = vmatpush1.bf16.msra.mxu0 0
        %455 = vmatprep.subr.bf16.mxu0 0
        %456 = vmatpush1.bf16.msra.mxu0 0
        %457 = vmatprep.subr.bf16.mxu0 0
        %458 = vmatpush1.bf16.msra.mxu0 0
        %459 = vmatprep.mubr.bf16.mxu0 0
        %460 = vmatmul.mubr.bf16.gmra.mrb[0].mxu0 %v276
        %v461 = vpop.f32.mrb[0].mxu0
        %v462 = vadd.f32 %v209, %v461
        %v463 = vpop.f32.mrb[0].mxu0
        %v464 = vadd.f32 %v213, %v463
        %v465 = vpop.f32.mrb[0].mxu0
        %v466 = vadd.f32 %v209, %v465
        %v467 = vpop.f32.mrb[0].mxu0
        %v468 = vadd.f32 %v213, %v467
        %469 = vmatprep.mubr.bf16.mxu0 0
        %470 = vmatmul.mubr.bf16.gmra.mrb[0].mxu0 %v279
        %v471 = vpop.f32.mrb[0].mxu0
        %v472 = vadd.f32 %v209, %v471
        %v473 = vpop.f32.mrb[0].mxu0
        %v474 = vadd.f32 %v213, %v473
        %v475 = vpop.f32.mrb[0].mxu0
        %v476 = vadd.f32 %v209, %v475
        %v477 = vpop.f32.mrb[0].mxu0
        %v478 = vadd.f32 %v213, %v477
        %479 = vmatprep.mubr.bf16.mxu0 0
        %480 = vmatmul.mubr.bf16.gmra.mrb[0].mxu0 %v282
        %v481 = vpop.f32.mrb[0].mxu0
        %v482 = vadd.f32 %v209, %v481
        %v483 = vpop.f32.mrb[0].mxu0
        %v484 = vadd.f32 %v213, %v483
        %v485 = vpop.f32.mrb[0].mxu0
        %v486 = vadd.f32 %v209, %v485
        %v487 = vpop.f32.mrb[0].mxu0
        %v488 = vadd.f32 %v213, %v487
        %489 = vmatprep.mubr.bf16.mxu0 0
        %490 = vmatmul.mubr.bf16.gmra.mrb[0].mxu0 %v285
        %v491 = vpop.f32.mrb[0].mxu0
        %v492 = vadd.f32 %v209, %v491
        %v493 = vpop.f32.mrb[0].mxu0
        %v494 = vadd.f32 %v213, %v493
        %v495 = vpop.f32.mrb[0].mxu0
        %v496 = vadd.f32 %v209, %v495
        %v497 = vpop.f32.mrb[0].mxu0
        %v498 = vadd.f32 %v213, %v497
        %499 = vmatprep.mubr.bf16.mxu0 0
        %500 = vmatmul.mubr.bf16.gmra.mrb[0].mxu0 %v288
        %v501 = vpop.f32.mrb[0].mxu0
        %v502 = vadd.f32 %v209, %v501
        %v503 = vpop.f32.mrb[0].mxu0
        %v504 = vadd.f32 %v213, %v503
        %v505 = vpop.f32.mrb[0].mxu0
        %v506 = vadd.f32 %v209, %v505
        %v507 = vpop.f32.mrb[0].mxu0
        %v508 = vadd.f32 %v213, %v507
        %509 = vmatprep.mubr.bf16.mxu0 0
        %510 = vmatmul.mubr.bf16.gmra.mrb[0].mxu0 %v291
        %v511 = vpop.f32.mrb[0].mxu0
        %v512 = vadd.f32 %v209, %v511
        %v513 = vpop.f32.mrb[0].mxu0
        %v514 = vadd.f32 %v213, %v513
        %v515 = vpop.f32.mrb[0].mxu0
        %v516 = vadd.f32 %v209, %v515
        %v517 = vpop.f32.mrb[0].mxu0
        %v518 = vadd.f32 %v213, %v517
        %519 = vmatprep.mubr.bf16.mxu0 0
        %520 = vmatmul.mubr.bf16.gmra.mrb[0].mxu0 %v294
        %v521 = vpop.f32.mrb[0].mxu0
        %v522 = vadd.f32 %v209, %v521
        %v523 = vpop.f32.mrb[0].mxu0
        %v524 = vadd.f32 %v213, %v523
        %v525 = vpop.f32.mrb[0].mxu0
        %v526 = vadd.f32 %v209, %v525
        %v527 = vpop.f32.mrb[0].mxu0
        %v528 = vadd.f32 %v213, %v527
        %529 = vdwg.mxu0
        %530 = vmatprep.subr.bf16.mxu0 %v316
        %531 = vmatpush1.bf16.msra.mxu0 %v313
        %532 = vmatprep.subr.bf16.mxu0 0
        %533 = vmatpush1.bf16.msra.mxu0 0
        %534 = vmatprep.subr.bf16.mxu0 0
        %535 = vmatpush1.bf16.msra.mxu0 0
        %536 = vmatprep.subr.bf16.mxu0 0
        %537 = vmatpush1.bf16.msra.mxu0 0
        %538 = vmatprep.subr.bf16.mxu0 0
        %539 = vmatpush1.bf16.msra.mxu0 0
        %540 = vmatprep.subr.bf16.mxu0 0
        %541 = vmatpush1.bf16.msra.mxu0 0
        %542 = vmatprep.subr.bf16.mxu0 0
        %543 = vmatpush1.bf16.msra.mxu0 0
        %544 = vmatprep.subr.bf16.mxu0 0
        %545 = vmatpush1.bf16.msra.mxu0 0
        %546 = vmatprep.subr.bf16.mxu0 0
        %547 = vmatpush1.bf16.msra.mxu0 0
        %548 = vmatprep.subr.bf16.mxu0 0
        %549 = vmatpush1.bf16.msra.mxu0 0
        %550 = vmatprep.subr.bf16.mxu0 0
        %551 = vmatpush1.bf16.msra.mxu0 0
        %552 = vmatprep.subr.bf16.mxu0 0
        %553 = vmatpush1.bf16.msra.mxu0 0
        %554 = vmatprep.subr.bf16.mxu0 0
        %555 = vmatpush1.bf16.msra.mxu0 0
        %556 = vmatprep.subr.bf16.mxu0 0
        %557 = vmatpush1.bf16.msra.mxu0 0
        %558 = vmatprep.subr.bf16.mxu0 0
        %559 = vmatpush1.bf16.msra.mxu0 0
        %560 = vmatprep.subr.bf16.mxu0 0
        %561 = vmatpush1.bf16.msra.mxu0 0
        %562 = vmatprep.mubr.bf16.mxu0 0
        %563 = vmatmul.mubr.bf16.gmra.mrb[0].mxu0 %v276
        %v564 = vpop.f32.mrb[0].mxu0
        %v565 = vadd.f32 %v217, %v564
        %v566 = vpop.f32.mrb[0].mxu0
        %v567 = vadd.f32 %v221, %v566
        %v568 = vpop.f32.mrb[0].mxu0
        %v569 = vadd.f32 %v217, %v568
        %v570 = vpop.f32.mrb[0].mxu0
        %v571 = vadd.f32 %v221, %v570
        %572 = vmatprep.mubr.bf16.mxu0 0
        %573 = vmatmul.mubr.bf16.gmra.mrb[0].mxu0 %v279
        %v574 = vpop.f32.mrb[0].mxu0
        %v575 = vadd.f32 %v217, %v574
        %v576 = vpop.f32.mrb[0].mxu0
        %v577 = vadd.f32 %v221, %v576
        %v578 = vpop.f32.mrb[0].mxu0
        %v579 = vadd.f32 %v217, %v578
        %v580 = vpop.f32.mrb[0].mxu0
        %v581 = vadd.f32 %v221, %v580
        %582 = vmatprep.mubr.bf16.mxu0 0
        %583 = vmatmul.mubr.bf16.gmra.mrb[0].mxu0 %v282
        %v584 = vpop.f32.mrb[0].mxu0
        %v585 = vadd.f32 %v217, %v584
        %v586 = vpop.f32.mrb[0].mxu0
        %v587 = vadd.f32 %v221, %v586
        %v588 = vpop.f32.mrb[0].mxu0
        %v589 = vadd.f32 %v217, %v588
        %v590 = vpop.f32.mrb[0].mxu0
        %v591 = vadd.f32 %v221, %v590
        %592 = vmatprep.mubr.bf16.mxu0 0
        %593 = vmatmul.mubr.bf16.gmra.mrb[0].mxu0 %v285
        %v594 = vpop.f32.mrb[0].mxu0
        %v595 = vadd.f32 %v217, %v594
        %v596 = vpop.f32.mrb[0].mxu0
        %v597 = vadd.f32 %v221, %v596
        %v598 = vpop.f32.mrb[0].mxu0
        %v599 = vadd.f32 %v217, %v598
        %v600 = vpop.f32.mrb[0].mxu0
        %v601 = vadd.f32 %v221, %v600
        %602 = vmatprep.mubr.bf16.mxu0 0
        %603 = vmatmul.mubr.bf16.gmra.mrb[0].mxu0 %v288
        %v604 = vpop.f32.mrb[0].mxu0
        %v605 = vadd.f32 %v217, %v604
        %v606 = vpop.f32.mrb[0].mxu0
        %v607 = vadd.f32 %v221, %v606
        %v608 = vpop.f32.mrb[0].mxu0
        %v609 = vadd.f32 %v217, %v608
        %v610 = vpop.f32.mrb[0].mxu0
        %v611 = vadd.f32 %v221, %v610
        %612 = vmatprep.mubr.bf16.mxu0 0
        %613 = vmatmul.mubr.bf16.gmra.mrb[0].mxu0 %v291
        %v614 = vpop.f32.mrb[0].mxu0
        %v615 = vadd.f32 %v217, %v614
        %v616 = vpop.f32.mrb[0].mxu0
        %v617 = vadd.f32 %v221, %v616
        %v618 = vpop.f32.mrb[0].mxu0
        %v619 = vadd.f32 %v217, %v618
        %v620 = vpop.f32.mrb[0].mxu0
        %v621 = vadd.f32 %v221, %v620
        %622 = vmatprep.mubr.bf16.mxu0 0
        %623 = vmatmul.mubr.bf16.gmra.mrb[0].mxu0 %v294
        %v624 = vpop.f32.mrb[0].mxu0
        %v625 = vadd.f32 %v217, %v624
        %v626 = vpop.f32.mrb[0].mxu0
        %v627 = vadd.f32 %v221, %v626
        %v628 = vpop.f32.mrb[0].mxu0
        %v629 = vadd.f32 %v217, %v628
        %v630 = vpop.f32.mrb[0].mxu0
        %v631 = vadd.f32 %v221, %v630
        %632 = vdwg.mxu0
        %633 = vmatprep.subr.bf16.mxu0 %v322
        %634 = vmatpush1.bf16.msra.mxu0 %v319
        %635 = vmatprep.subr.bf16.mxu0 0
        %636 = vmatpush1.bf16.msra.mxu0 0
        %637 = vmatprep.subr.bf16.mxu0 0
        %638 = vmatpush1.bf16.msra.mxu0 0
        %639 = vmatprep.subr.bf16.mxu0 0
        %640 = vmatpush1.bf16.msra.mxu0 0
        %641 = vmatprep.subr.bf16.mxu0 0
        %642 = vmatpush1.bf16.msra.mxu0 0
        %643 = vmatprep.subr.bf16.mxu0 0
        %644 = vmatpush1.bf16.msra.mxu0 0
        %645 = vmatprep.subr.bf16.mxu0 0
        %646 = vmatpush1.bf16.msra.mxu0 0
        %647 = vmatprep.subr.bf16.mxu0 0
        %648 = vmatpush1.bf16.msra.mxu0 0
        %649 = vmatprep.subr.bf16.mxu0 0
        %650 = vmatpush1.bf16.msra.mxu0 0
        %651 = vmatprep.subr.bf16.mxu0 0
        %652 = vmatpush1.bf16.msra.mxu0 0
        %653 = vmatprep.subr.bf16.mxu0 0
        %654 = vmatpush1.bf16.msra.mxu0 0
        %655 = vmatprep.subr.bf16.mxu0 0
        %656 = vmatpush1.bf16.msra.mxu0 0
        %657 = vmatprep.subr.bf16.mxu0 0
        %658 = vmatpush1.bf16.msra.mxu0 0
        %659 = vmatprep.subr.bf16.mxu0 0
        %660 = vmatpush1.bf16.msra.mxu0 0
        %661 = vmatprep.subr.bf16.mxu0 0
        %662 = vmatpush1.bf16.msra.mxu0 0
        %663 = vmatprep.subr.bf16.mxu0 0
        %664 = vmatpush1.bf16.msra.mxu0 0
        %665 = vmatprep.mubr.bf16.mxu0 0
        %666 = vmatmul.mubr.bf16.gmra.mrb[0].mxu0 %v276
        %v667 = vpop.f32.mrb[0].mxu0
        %v668 = vadd.f32 %v225, %v667
        %v669 = vpop.f32.mrb[0].mxu0
        %v670 = vadd.f32 %v229, %v669
        %v671 = vpop.f32.mrb[0].mxu0
        %v672 = vadd.f32 %v225, %v671
        %v673 = vpop.f32.mrb[0].mxu0
        %v674 = vadd.f32 %v229, %v673
        %675 = vmatprep.mubr.bf16.mxu0 0
        %676 = vmatmul.mubr.bf16.gmra.mrb[0].mxu0 %v279
        %v677 = vpop.f32.mrb[0].mxu0
        %v678 = vadd.f32 %v225, %v677
        %v679 = vpop.f32.mrb[0].mxu0
        %v680 = vadd.f32 %v229, %v679
        %v681 = vpop.f32.mrb[0].mxu0
        %v682 = vadd.f32 %v225, %v681
        %v683 = vpop.f32.mrb[0].mxu0
        %v684 = vadd.f32 %v229, %v683
        %685 = vmatprep.mubr.bf16.mxu0 0
        %686 = vmatmul.mubr.bf16.gmra.mrb[0].mxu0 %v282
        %v687 = vpop.f32.mrb[0].mxu0
        %v688 = vadd.f32 %v225, %v687
        %v689 = vpop.f32.mrb[0].mxu0
        %v690 = vadd.f32 %v229, %v689
        %v691 = vpop.f32.mrb[0].mxu0
        %v692 = vadd.f32 %v225, %v691
        %v693 = vpop.f32.mrb[0].mxu0
        %v694 = vadd.f32 %v229, %v693
        %695 = vmatprep.mubr.bf16.mxu0 0
        %696 = vmatmul.mubr.bf16.gmra.mrb[0].mxu0 %v285
        %v697 = vpop.f32.mrb[0].mxu0
        %v698 = vadd.f32 %v225, %v697
        %v699 = vpop.f32.mrb[0].mxu0
        %v700 = vadd.f32 %v229, %v699
        %v701 = vpop.f32.mrb[0].mxu0
        %v702 = vadd.f32 %v225, %v701
        %v703 = vpop.f32.mrb[0].mxu0
        %v704 = vadd.f32 %v229, %v703
        %705 = vmatprep.mubr.bf16.mxu0 0
        %706 = vmatmul.mubr.bf16.gmra.mrb[0].mxu0 %v288
        %v707 = vpop.f32.mrb[0].mxu0
        %v708 = vadd.f32 %v225, %v707
        %v709 = vpop.f32.mrb[0].mxu0
        %v710 = vadd.f32 %v229, %v709
        %v711 = vpop.f32.mrb[0].mxu0
        %v712 = vadd.f32 %v225, %v711
        %v713 = vpop.f32.mrb[0].mxu0
        %v714 = vadd.f32 %v229, %v713
        %715 = vmatprep.mubr.bf16.mxu0 0
        %716 = vmatmul.mubr.bf16.gmra.mrb[0].mxu0 %v291
        %v717 = vpop.f32.mrb[0].mxu0
        %v718 = vadd.f32 %v225, %v717
        %v719 = vpop.f32.mrb[0].mxu0
        %v720 = vadd.f32 %v229, %v719
        %v721 = vpop.f32.mrb[0].mxu0
        %v722 = vadd.f32 %v225, %v721
        %v723 = vpop.f32.mrb[0].mxu0
        %v724 = vadd.f32 %v229, %v723
        %725 = vmatprep.mubr.bf16.mxu0 0
        %726 = vmatmul.mubr.bf16.gmra.mrb[0].mxu0 %v294
        %v727 = vpop.f32.mrb[0].mxu0
        %v728 = vadd.f32 %v225, %v727
        %v729 = vpop.f32.mrb[0].mxu0
        %v730 = vadd.f32 %v229, %v729
        %v731 = vpop.f32.mrb[0].mxu0
        %v732 = vadd.f32 %v225, %v731
        %v733 = vpop.f32.mrb[0].mxu0
        %v734 = vadd.f32 %v229, %v733
        %735 = vdwg.mxu0
        %v736 = vmax.f32 %v359, 0.0
        %v737 = vmax.f32 %v361, 0.0
        %v738 = vmax.f32 %v462, 0.0
        %v739 = vmax.f32 %v464, 0.0
        %v740 = vmax.f32 %v565, 0.0
        %v741 = vmax.f32 %v567, 0.0
        %v742 = vmax.f32 %v668, 0.0
        %v743 = vmax.f32 %v670, 0.0
        %v744 = vmax.f32 %v363, 0.0
        %v745 = vmax.f32 %v365, 0.0
        %v746 = vmax.f32 %v466, 0.0
        %v747 = vmax.f32 %v468, 0.0
        %v748 = vmax.f32 %v569, 0.0
        %v749 = vmax.f32 %v571, 0.0
        %v750 = vmax.f32 %v672, 0.0
        %v751 = vmax.f32 %v674, 0.0
        %v752 = vmax.f32 %v369, 0.0
        %v753 = vmax.f32 %v371, 0.0
        %v754 = vmax.f32 %v472, 0.0
        %v755 = vmax.f32 %v474, 0.0
        %v756 = vmax.f32 %v575, 0.0
        %v757 = vmax.f32 %v577, 0.0
        %v758 = vmax.f32 %v678, 0.0
        %v759 = vmax.f32 %v680, 0.0
        %v760 = vmax.f32 %v373, 0.0
        %v761 = vmax.f32 %v375, 0.0
        %v762 = vmax.f32 %v476, 0.0
        %v763 = vmax.f32 %v478, 0.0
        %v764 = vmax.f32 %v579, 0.0
        %v765 = vmax.f32 %v581, 0.0
        %v766 = vmax.f32 %v682, 0.0
        %v767 = vmax.f32 %v684, 0.0
        %v768 = vmax.f32 %v379, 0.0
        %v769 = vmax.f32 %v381, 0.0
        %v770 = vmax.f32 %v482, 0.0
        %v771 = vmax.f32 %v484, 0.0
        %v772 = vmax.f32 %v585, 0.0
        %v773 = vmax.f32 %v587, 0.0
        %v774 = vmax.f32 %v688, 0.0
        %v775 = vmax.f32 %v690, 0.0
        %v776 = vmax.f32 %v383, 0.0
        %v777 = vmax.f32 %v385, 0.0
        %v778 = vmax.f32 %v486, 0.0
        %v779 = vmax.f32 %v488, 0.0
        %v780 = vmax.f32 %v589, 0.0
        %v781 = vmax.f32 %v591, 0.0
        %v782 = vmax.f32 %v692, 0.0
        %v783 = vmax.f32 %v694, 0.0
        %v784 = vmax.f32 %v389, 0.0
        %v785 = vmax.f32 %v391, 0.0
        %v786 = vmax.f32 %v492, 0.0
        %v787 = vmax.f32 %v494, 0.0
        %v788 = vmax.f32 %v595, 0.0
        %v789 = vmax.f32 %v597, 0.0
        %v790 = vmax.f32 %v698, 0.0
        %v791 = vmax.f32 %v700, 0.0
        %v792 = vmax.f32 %v393, 0.0
        %v793 = vmax.f32 %v395, 0.0
        %v794 = vmax.f32 %v496, 0.0
        %v795 = vmax.f32 %v498, 0.0
        %v796 = vmax.f32 %v599, 0.0
        %v797 = vmax.f32 %v601, 0.0
        %v798 = vmax.f32 %v702, 0.0
        %v799 = vmax.f32 %v704, 0.0
        %v800 = vmax.f32 %v399, 0.0
        %v801 = vmax.f32 %v401, 0.0
        %v802 = vmax.f32 %v502, 0.0
        %v803 = vmax.f32 %v504, 0.0
        %v804 = vmax.f32 %v605, 0.0
        %v805 = vmax.f32 %v607, 0.0
        %v806 = vmax.f32 %v708, 0.0
        %v807 = vmax.f32 %v710, 0.0
        %v808 = vmax.f32 %v403, 0.0
        %v809 = vmax.f32 %v405, 0.0
        %v810 = vmax.f32 %v506, 0.0
        %v811 = vmax.f32 %v508, 0.0
        %v812 = vmax.f32 %v609, 0.0
        %v813 = vmax.f32 %v611, 0.0
        %v814 = vmax.f32 %v712, 0.0
        %v815 = vmax.f32 %v714, 0.0
        %v816 = vmax.f32 %v409, 0.0
        %v817 = vmax.f32 %v411, 0.0
        %v818 = vmax.f32 %v512, 0.0
        %v819 = vmax.f32 %v514, 0.0
        %v820 = vmax.f32 %v615, 0.0
        %v821 = vmax.f32 %v617, 0.0
        %v822 = vmax.f32 %v718, 0.0
        %v823 = vmax.f32 %v720, 0.0
        %v824 = vmax.f32 %v413, 0.0
        %v825 = vmax.f32 %v415, 0.0
        %v826 = vmax.f32 %v516, 0.0
        %v827 = vmax.f32 %v518, 0.0
        %v828 = vmax.f32 %v619, 0.0
        %v829 = vmax.f32 %v621, 0.0
        %v830 = vmax.f32 %v722, 0.0
        %v831 = vmax.f32 %v724, 0.0
        %v832 = vmax.f32 %v419, 0.0
        %v833 = vmax.f32 %v421, 0.0
        %v834 = vmax.f32 %v522, 0.0
        %v835 = vmax.f32 %v524, 0.0
        %v836 = vmax.f32 %v625, 0.0
        %v837 = vmax.f32 %v627, 0.0
        %v838 = vmax.f32 %v728, 0.0
        %v839 = vmax.f32 %v730, 0.0
        %v840 = vmax.f32 %v423, 0.0
        %v841 = vmax.f32 %v425, 0.0
        %v842 = vmax.f32 %v526, 0.0
        %v843 = vmax.f32 %v528, 0.0
        %v844 = vmax.f32 %v629, 0.0
        %v845 = vmax.f32 %v631, 0.0
        %v846 = vmax.f32 %v732, 0.0
        %v847 = vmax.f32 %v734, 0.0
        %v848 = vpack.c.bf16 %v744, %v736
        %v849 = vpack.c.bf16 %v745, %v737
        %v850 = vpack.c.bf16 %v746, %v738
        %v851 = vpack.c.bf16 %v747, %v739
        %v852 = vpack.c.bf16 %v748, %v740
        %v853 = vpack.c.bf16 %v749, %v741
        %v854 = vpack.c.bf16 %v750, %v742
        %v855 = vpack.c.bf16 %v751, %v743
        %v856 = vpack.c.bf16 %v760, %v752
        %v857 = vpack.c.bf16 %v761, %v753
        %v858 = vpack.c.bf16 %v762, %v754
        %v859 = vpack.c.bf16 %v763, %v755
        %v860 = vpack.c.bf16 %v764, %v756
        %v861 = vpack.c.bf16 %v765, %v757
        %v862 = vpack.c.bf16 %v766, %v758
        %v863 = vpack.c.bf16 %v767, %v759
        %v864 = vpack.c.bf16 %v776, %v768
        %v865 = vpack.c.bf16 %v777, %v769
        %v866 = vpack.c.bf16 %v778, %v770
        %v867 = vpack.c.bf16 %v779, %v771
        %v868 = vpack.c.bf16 %v780, %v772
        %v869 = vpack.c.bf16 %v781, %v773
        %v870 = vpack.c.bf16 %v782, %v774
        %v871 = vpack.c.bf16 %v783, %v775
        %v872 = vpack.c.bf16 %v792, %v784
        %v873 = vpack.c.bf16 %v793, %v785
        %v874 = vpack.c.bf16 %v794, %v786
        %v875 = vpack.c.bf16 %v795, %v787
        %v876 = vpack.c.bf16 %v796, %v788
        %v877 = vpack.c.bf16 %v797, %v789
        %v878 = vpack.c.bf16 %v798, %v790
        %v879 = vpack.c.bf16 %v799, %v791
        %v880 = vpack.c.bf16 %v808, %v800
        %v881 = vpack.c.bf16 %v809, %v801
        %v882 = vpack.c.bf16 %v810, %v802
        %v883 = vpack.c.bf16 %v811, %v803
        %v884 = vpack.c.bf16 %v812, %v804
        %v885 = vpack.c.bf16 %v813, %v805
        %v886 = vpack.c.bf16 %v814, %v806
        %v887 = vpack.c.bf16 %v815, %v807
        %v888 = vpack.c.bf16 %v824, %v816
        %v889 = vpack.c.bf16 %v825, %v817
        %v890 = vpack.c.bf16 %v826, %v818
        %v891 = vpack.c.bf16 %v827, %v819
        %v892 = vpack.c.bf16 %v828, %v820
        %v893 = vpack.c.bf16 %v829, %v821
        %v894 = vpack.c.bf16 %v830, %v822
        %v895 = vpack.c.bf16 %v831, %v823
        %v896 = vpack.c.bf16 %v840, %v832
        %v897 = vpack.c.bf16 %v841, %v833
        %v898 = vpack.c.bf16 %v842, %v834
        %v899 = vpack.c.bf16 %v843, %v835
        %v900 = vpack.c.bf16 %v844, %v836
        %v901 = vpack.c.bf16 %v845, %v837
        %v902 = vpack.c.bf16 %v846, %v838
        %v903 = vpack.c.bf16 %v847, %v839
        %v960 = vunpack.c.l.b16 %v848
        %v961 = vunpack.c.l.b16 %v849
        %v962 = vunpack.c.l.b16 %v850
        %v963 = vunpack.c.l.b16 %v851
        %v964 = vunpack.c.l.b16 %v852
        %v965 = vunpack.c.l.b16 %v853
        %v966 = vunpack.c.l.b16 %v854
        %v967 = vunpack.c.l.b16 %v855
        %v968 = vunpack.c.h.b16 %v848
        %v969 = vunpack.c.h.b16 %v849
        %v970 = vunpack.c.h.b16 %v850
        %v971 = vunpack.c.h.b16 %v851
        %v972 = vunpack.c.h.b16 %v852
        %v973 = vunpack.c.h.b16 %v853
        %v974 = vunpack.c.h.b16 %v854
        %v975 = vunpack.c.h.b16 %v855
        %v976 = vunpack.c.l.b16 %v856
        %v977 = vunpack.c.l.b16 %v857
        %v978 = vunpack.c.l.b16 %v858
        %v979 = vunpack.c.l.b16 %v859
        %v980 = vunpack.c.l.b16 %v860
        %v981 = vunpack.c.l.b16 %v861
        %v982 = vunpack.c.l.b16 %v862
        %v983 = vunpack.c.l.b16 %v863
        %v984 = vunpack.c.h.b16 %v856
        %v985 = vunpack.c.h.b16 %v857
        %v986 = vunpack.c.h.b16 %v858
        %v987 = vunpack.c.h.b16 %v859
        %v988 = vunpack.c.h.b16 %v860
        %v989 = vunpack.c.h.b16 %v861
        %v990 = vunpack.c.h.b16 %v862
        %v991 = vunpack.c.h.b16 %v863
        %v992 = vunpack.c.l.b16 %v864
        %v993 = vunpack.c.l.b16 %v865
        %v994 = vunpack.c.l.b16 %v866
        %v995 = vunpack.c.l.b16 %v867
        %v996 = vunpack.c.l.b16 %v868
        %v997 = vunpack.c.l.b16 %v869
        %v998 = vunpack.c.l.b16 %v870
        %v999 = vunpack.c.l.b16 %v871
        %v1000 = vunpack.c.h.b16 %v864
        %v1001 = vunpack.c.h.b16 %v865
        %v1002 = vunpack.c.h.b16 %v866
        %v1003 = vunpack.c.h.b16 %v867
        %v1004 = vunpack.c.h.b16 %v868
        %v1005 = vunpack.c.h.b16 %v869
        %v1006 = vunpack.c.h.b16 %v870
        %v1007 = vunpack.c.h.b16 %v871
        %v1008 = vunpack.c.l.b16 %v872
        %v1009 = vunpack.c.l.b16 %v873
        %v1010 = vunpack.c.l.b16 %v874
        %v1011 = vunpack.c.l.b16 %v875
        %v1012 = vunpack.c.l.b16 %v876
        %v1013 = vunpack.c.l.b16 %v877
        %v1014 = vunpack.c.l.b16 %v878
        %v1015 = vunpack.c.l.b16 %v879
        %v1016 = vunpack.c.h.b16 %v872
        %v1017 = vunpack.c.h.b16 %v873
        %v1018 = vunpack.c.h.b16 %v874
        %v1019 = vunpack.c.h.b16 %v875
        %v1020 = vunpack.c.h.b16 %v876
        %v1021 = vunpack.c.h.b16 %v877
        %v1022 = vunpack.c.h.b16 %v878
        %v1023 = vunpack.c.h.b16 %v879
        %v1024 = vunpack.c.l.b16 %v880
        %v1025 = vunpack.c.l.b16 %v881
        %v1026 = vunpack.c.l.b16 %v882
        %v1027 = vunpack.c.l.b16 %v883
        %v1028 = vunpack.c.l.b16 %v884
        %v1029 = vunpack.c.l.b16 %v885
        %v1030 = vunpack.c.l.b16 %v886
        %v1031 = vunpack.c.l.b16 %v887
        %v1032 = vunpack.c.h.b16 %v880
        %v1033 = vunpack.c.h.b16 %v881
        %v1034 = vunpack.c.h.b16 %v882
        %v1035 = vunpack.c.h.b16 %v883
        %v1036 = vunpack.c.h.b16 %v884
        %v1037 = vunpack.c.h.b16 %v885
        %v1038 = vunpack.c.h.b16 %v886
        %v1039 = vunpack.c.h.b16 %v887
        %v1040 = vunpack.c.l.b16 %v888
        %v1041 = vunpack.c.l.b16 %v889
        %v1042 = vunpack.c.l.b16 %v890
        %v1043 = vunpack.c.l.b16 %v891
        %v1044 = vunpack.c.l.b16 %v892
        %v1045 = vunpack.c.l.b16 %v893
        %v1046 = vunpack.c.l.b16 %v894
        %v1047 = vunpack.c.l.b16 %v895
        %v1048 = vunpack.c.h.b16 %v888
        %v1049 = vunpack.c.h.b16 %v889
        %v1050 = vunpack.c.h.b16 %v890
        %v1051 = vunpack.c.h.b16 %v891
        %v1052 = vunpack.c.h.b16 %v892
        %v1053 = vunpack.c.h.b16 %v893
        %v1054 = vunpack.c.h.b16 %v894
        %v1055 = vunpack.c.h.b16 %v895
        %v1056 = vunpack.c.l.b16 %v896
        %v1057 = vunpack.c.l.b16 %v897
        %v1058 = vunpack.c.l.b16 %v898
        %v1059 = vunpack.c.l.b16 %v899
        %v1060 = vunpack.c.l.b16 %v900
        %v1061 = vunpack.c.l.b16 %v901
        %v1062 = vunpack.c.l.b16 %v902
        %v1063 = vunpack.c.l.b16 %v903
        %v1064 = vunpack.c.h.b16 %v896
        %v1065 = vunpack.c.h.b16 %v897
        %v1066 = vunpack.c.h.b16 %v898
        %v1067 = vunpack.c.h.b16 %v899
        %v1068 = vunpack.c.h.b16 %v900
        %v1069 = vunpack.c.h.b16 %v901
        %v1070 = vunpack.c.h.b16 %v902
        %v1071 = vunpack.c.h.b16 %v903
        %v1072 = vpack.c.b16 %v961, %v960
        %v1073 = vpack.c.b16 %v963, %v962
        %v1074 = vpack.c.b16 %v965, %v964
        %v1075 = vpack.c.b16 %v967, %v966
        %v1076 = vpack.c.b16 %v969, %v968
        %v1077 = vpack.c.b16 %v971, %v970
        %v1078 = vpack.c.b16 %v973, %v972
        %v1079 = vpack.c.b16 %v975, %v974
        %v1080 = vpack.c.b16 %v977, %v976
        %v1081 = vpack.c.b16 %v979, %v978
        %v1082 = vpack.c.b16 %v981, %v980
        %v1083 = vpack.c.b16 %v983, %v982
        %v1084 = vpack.c.b16 %v985, %v984
        %v1085 = vpack.c.b16 %v987, %v986
        %v1086 = vpack.c.b16 %v989, %v988
        %v1087 = vpack.c.b16 %v991, %v990
        %v1088 = vpack.c.b16 %v993, %v992
        %v1089 = vpack.c.b16 %v995, %v994
        %v1090 = vpack.c.b16 %v997, %v996
        %v1091 = vpack.c.b16 %v999, %v998
        %v1092 = vpack.c.b16 %v1001, %v1000
        %v1093 = vpack.c.b16 %v1003, %v1002
        %v1094 = vpack.c.b16 %v1005, %v1004
        %v1095 = vpack.c.b16 %v1007, %v1006
        %v1096 = vpack.c.b16 %v1009, %v1008
        %v1097 = vpack.c.b16 %v1011, %v1010
        %v1098 = vpack.c.b16 %v1013, %v1012
        %v1099 = vpack.c.b16 %v1015, %v1014
        %v1100 = vpack.c.b16 %v1017, %v1016
        %v1101 = vpack.c.b16 %v1019, %v1018
        %v1102 = vpack.c.b16 %v1021, %v1020
        %v1103 = vpack.c.b16 %v1023, %v1022
        %v1104 = vpack.c.b16 %v1025, %v1024
        %v1105 = vpack.c.b16 %v1027, %v1026
        %v1106 = vpack.c.b16 %v1029, %v1028
        %v1107 = vpack.c.b16 %v1031, %v1030
        %v1108 = vpack.c.b16 %v1033, %v1032
        %v1109 = vpack.c.b16 %v1035, %v1034
        %v1110 = vpack.c.b16 %v1037, %v1036
        %v1111 = vpack.c.b16 %v1039, %v1038
        %v1112 = vpack.c.b16 %v1041, %v1040
        %v1113 = vpack.c.b16 %v1043, %v1042
        %v1114 = vpack.c.b16 %v1045, %v1044
        %v1115 = vpack.c.b16 %v1047, %v1046
        %v1116 = vpack.c.b16 %v1049, %v1048
        %v1117 = vpack.c.b16 %v1051, %v1050
        %v1118 = vpack.c.b16 %v1053, %v1052
        %v1119 = vpack.c.b16 %v1055, %v1054
        %v1120 = vpack.c.b16 %v1057, %v1056
        %v1121 = vpack.c.b16 %v1059, %v1058
        %v1122 = vpack.c.b16 %v1061, %v1060
        %v1123 = vpack.c.b16 %v1063, %v1062
        %v1124 = vpack.c.b16 %v1065, %v1064
        %v1125 = vpack.c.b16 %v1067, %v1066
        %v1126 = vpack.c.b16 %v1069, %v1068
        %v1127 = vpack.c.b16 %v1071, %v1070
        %1184 = vst [vmem:[%s164] sm:$0xff] %v1072
        %1185 = vst [vmem:[%s164 + $0x8] sm:$0xff] %v1073
        %1186 = vst [vmem:[%s164 + $0x10] sm:$0xff] %v1074
        %1187 = vst [vmem:[%s164 + $0x18] sm:$0xff] %v1075
        %1188 = vst [vmem:[%s164 + $0x20] sm:$0xff] %v1076
        %1189 = vst [vmem:[%s164 + $0x28] sm:$0xff] %v1077
        %1190 = vst [vmem:[%s164 + $0x30] sm:$0xff] %v1078
        %1191 = vst [vmem:[%s164 + $0x38] sm:$0xff] %v1079
        %1192 = vst [vmem:[%s164 + $0x40] sm:$0xff] %v1080
        %1193 = vst [vmem:[%s164 + $0x48] sm:$0xff] %v1081
        %1194 = vst [vmem:[%s164 + $0x50] sm:$0xff] %v1082
        %1195 = vst [vmem:[%s164 + $0x58] sm:$0xff] %v1083
        %1196 = vst [vmem:[%s164 + $0x60] sm:$0xff] %v1084
        %1197 = vst [vmem:[%s164 + $0x68] sm:$0xff] %v1085
        %1198 = vst [vmem:[%s164 + $0x70] sm:$0xff] %v1086
        %1199 = vst [vmem:[%s164 + $0x78] sm:$0xff] %v1087
        %1200 = vst [vmem:[%s164 + $0x80] sm:$0xff] %v1088
        %1201 = vst [vmem:[%s164 + $0x88] sm:$0xff] %v1089
        %1202 = vst [vmem:[%s164 + $0x90] sm:$0xff] %v1090
        %1203 = vst [vmem:[%s164 + $0x98] sm:$0xff] %v1091
        %1204 = vst [vmem:[%s164 + $0xa0] sm:$0xff] %v1092
        %1205 = vst [vmem:[%s164 + $0xa8] sm:$0xff] %v1093
        %1206 = vst [vmem:[%s164 + $0xb0] sm:$0xff] %v1094
        %1207 = vst [vmem:[%s164 + $0xb8] sm:$0xff] %v1095
        %1208 = vst [vmem:[%s164 + $0xc0] sm:$0xff] %v1096
        %1209 = vst [vmem:[%s164 + $0xc8] sm:$0xff] %v1097
        %1210 = vst [vmem:[%s164 + $0xd0] sm:$0xff] %v1098
        %1211 = vst [vmem:[%s164 + $0xd8] sm:$0xff] %v1099
        %1212 = vst [vmem:[%s164 + $0xe0] sm:$0xff] %v1100
        %1213 = vst [vmem:[%s164 + $0xe8] sm:$0xff] %v1101
        %1214 = vst [vmem:[%s164 + $0xf0] sm:$0xff] %v1102
        %1215 = vst [vmem:[%s164 + $0xf8] sm:$0xff] %v1103
        %1216 = vst [vmem:[%s164 + $0x100] sm:$0xff] %v1104
        %1217 = vst [vmem:[%s164 + $0x108] sm:$0xff] %v1105
        %1218 = vst [vmem:[%s164 + $0x110] sm:$0xff] %v1106
        %1219 = vst [vmem:[%s164 + $0x118] sm:$0xff] %v1107
        %1220 = vst [vmem:[%s164 + $0x120] sm:$0xff] %v1108
        %1221 = vst [vmem:[%s164 + $0x128] sm:$0xff] %v1109
        %1222 = vst [vmem:[%s164 + $0x130] sm:$0xff] %v1110
        %1223 = vst [vmem:[%s164 + $0x138] sm:$0xff] %v1111
        %1224 = vst [vmem:[%s164 + $0x140] sm:$0xff] %v1112
        %1225 = vst [vmem:[%s164 + $0x148] sm:$0xff] %v1113
        %1226 = vst [vmem:[%s164 + $0x150] sm:$0xff] %v1114
        %1227 = vst [vmem:[%s164 + $0x158] sm:$0xff] %v1115
        %1228 = vst [vmem:[%s164 + $0x160] sm:$0xff] %v1116
        %1229 = vst [vmem:[%s164 + $0x168] sm:$0xff] %v1117
        %1230 = vst [vmem:[%s164 + $0x170] sm:$0xff] %v1118
        %1231 = vst [vmem:[%s164 + $0x178] sm:$0xff] %v1119
        %1232 = vst [vmem:[%s164 + $0x180] sm:$0xff] %v1120
        %1233 = vst [vmem:[%s164 + $0x188] sm:$0xff] %v1121
        %1234 = vst [vmem:[%s164 + $0x190] sm:$0xff] %v1122
        %1235 = vst [vmem:[%s164 + $0x198] sm:$0xff] %v1123
        %1236 = vst [vmem:[%s164 + $0x1a0] sm:$0xff] %v1124
        %1237 = vst [vmem:[%s164 + $0x1a8] sm:$0xff] %v1125
        %1238 = vst [vmem:[%s164 + $0x1b0] sm:$0xff] %v1126
        %1239 = vst [vmem:[%s164 + $0x1b8] sm:$0xff] %v1127
        %s1240 = sand.u32 %s93, 1
        %s1241 = scalar_lea.sflag [#allocation3], %s1240
        %s1242 = sand.u32 %s93, 1
        %s1243 = smul.addr %s1242, 448
        %s1244 = scalar_lea.vmem [#allocation2], %s1243
        // Predicated region
        $region33: #{tpu_custom_call.1} parent=31 // pred_check
          %p1245 = pneg %p103
        $region34: #{tpu_custom_call.1} parent=31 // pred_check_branch
          %1247 = sbr.rel (%p1245) target = $region36
        $region35: #{tpu_custom_call.1} parent=31 // pred_region
          %s1248 = smul.u32 14, %s17
          %s1250 = ssub.s32 7168, 7168
          %1251 = vsyncadd %s1241, %s1250
          %s1252 = smul.addr %s1248, 8
          %s1253 = smul.addr %s1252, 64
          %s1254 = scalar_lea.hbm %s3, %s1253
          %s1255 = sshll.u32 %s1244, 4
          %s1256 = int_to_ptr.vmem [resolvable:$true] %s1255
          %1261 = dma.vmem_to_hbm [thread:$0]  %s1256, 7168, %s1254, %s1241, 512, 512, 32
        $region36: #{tpu_custom_call.1} parent=31 // pred_fallthru
          _
      $region32: #{tpu_custom_call.1} parent=5 // pred_fallthru
        _
      %p1262 = scmp.le.s32.totalorder 2, %s12
      // Predicated region
      $region37: #{tpu_custom_call.1} parent=5 // pred_check
        %p1263 = pneg %p1262
      $region38: #{tpu_custom_call.1} parent=5 // pred_check_branch
        %1265 = sbr.rel (%p1263) target = $region40
      $region39: #{tpu_custom_call.1} parent=5 // pred_region
        %s1266 = ssub.s32 %s12, 2
        // Predicated region
        $region41: #{tpu_custom_call.1} parent=39 // pred_check
          %p1267 = pneg %p109
        $region42: #{tpu_custom_call.1} parent=39 // pred_check_branch
          %1269 = sbr.rel (%p1267) target = $region44
        $region43: #{tpu_custom_call.1} parent=39 // pred_region
          %s1270 = sand.u32 %s94, 1
          %s1271 = scalar_lea.sflag [#allocation3], %s1270
          %s1272 = sand.u32 %s94, 1
          %s1273 = smul.addr %s1272, 448
          %s1274 = scalar_lea.vmem [#allocation2], %s1273
          %1275 = dma.done %s1271, 7168
        $region44: #{tpu_custom_call.1} parent=39 // pred_fallthru
          _
      $region40: #{tpu_custom_call.1} parent=5 // pred_fallthru
        _
    $region6: #{tpu_custom_call.1} parent=1 // loop_footer
      %s16 = sadd.s32 1, %s12
    $region7: #{tpu_custom_call.1} parent=1 // loop_footer_branch
      %11 = sbr.rel target = $region3
    $region8: #{tpu_custom_call.1} parent=1 // loop_exit
      _
    %1276 = vsyncpa [#allocation3], 1
    %s1277 = scalar_lea.sflag [#allocation3], 1
    %1278 = vsyncpa %s1277, 1

</llo_original>
